<compile_context>
chip_gen: v6e
topology: v6e:2x2x1
jax: 0.10.0
libtpu: 0.0.40
codegen_flags: <defaults>
</compile_context>

<pallas_src>
import numpy as np

import jax
import jax.numpy as jnp
from jax.experimental import pallas as pl
from jax.experimental.pallas import tpu as pltpu


def _cdiv(a, b):
    return -(-a // b)


def _vmem_capacity_bytes():
    """Physical per-core VMEM; conservative fallback if the query fails."""
    try:
        return int(pltpu.get_tpu_info().vmem_capacity_bytes)
    except Exception:
        return 64 * 1024 * 1024  # v7x-sized fallback (smallest of the targets)


def _num_tensorcores():
    """Best-effort TensorCores-per-device (v7x / megacore = 2, else 1)."""
    try:
        kind = str(jax.devices()[0].device_kind).lower()
        if any(tag in kind for tag in ("v7", "v4", "v5p")):
            return 2
    except Exception:
        pass
    return 1


def _conv_as_matrix(conv_weight, H, W):
    """Express the 2->1 channel KxK 'same' cross-correlation (zero padding, no
    bias) as a single (2*HW, HW) f32 matrix M such that, for flattened maps,
        conv(cat([avg, mx], 1))[b, 0].ravel() == concat([avg_f[b], mx_f[b]]) @ M
    Built host-side with numpy (one-time cost; cache per (weight, H, W)
    upstream if called every step)."""
    w = np.asarray(jax.device_get(conv_weight), dtype=np.float32)
    K = int(w.shape[-1])
    P = K // 2
    HW = H * W
    w = w.reshape(2, K, K)

    T = np.zeros((2, HW, HW), np.float32)
    p_out = np.arange(HW)
    h_out, w_out = p_out // W, p_out % W
    for kh in range(K):
        for kw in range(K):
            h_in = h_out + (kh - P)
            w_in = w_out + (kw - P)
            valid = (h_in >= 0) & (h_in < H) & (w_in >= 0) & (w_in < W)
            p_in = h_in[valid] * W + w_in[valid]
            po = p_out[valid]
            # (p_in, po) pairs are unique within a tap -> plain add is safe.
            T[0, p_in, po] += w[0, kh, kw]
            T[1, p_in, po] += w[1, kh, kw]
    return T.reshape(2 * HW, HW)


def _sa_kernel(t_ref, x_ref, o_ref):
    """One (bt, C, HW) block per grid step.

    t_ref : VMEM (2*HW, HW) f32 — conv-as-matmul weights (grid-invariant block)
    x_ref : VMEM (bt, C, HW)    — input tile, lane-dense (HW on lanes)
    o_ref : VMEM (bt, C, HW)    — output tile
    """
    x = x_ref[...]                                       # input dtype, no full-tile upcast

    # Channel reductions (dim=1 of NCHW). Mean accumulates in f32.
    avg = jnp.mean(x, axis=1, dtype=jnp.float32)         # (bt, HW) f32
    mx = jnp.max(x, axis=1).astype(jnp.float32)          # (bt, HW) f32

    # 7x7 'same' conv (2 -> 1 channels, no bias) as ONE MXU matmul:
    # concat along lanes (HW multiple of 128 -> aligned, no relayout).
    am = jnp.concatenate([avg, mx], axis=-1)             # (bt, 2*HW)
    gate = jax.nn.sigmoid(
        jnp.dot(am, t_ref[...], preferred_element_type=jnp.float32))  # (bt, HW) f32

    # Gate*x in the input dtype (cast gate once); exact for f32 inputs.
    o_ref[...] = (gate.astype(x.dtype)[:, None, :] * x).astype(o_ref.dtype)


def spatial_attention(x, conv_weight, *, block_batch=None, vmem_limit_bytes=None):
    """x: (B, C, H, W); conv_weight: (1, 2, K, K) like nn.Conv2d(2, 1, K, bias=False)."""
    B, C, H, W = x.shape
    HW = H * W
    itemsize = jnp.dtype(x.dtype).itemsize

    # Generation-aware VMEM limit: 48 MiB on 128 MiB parts, 40 MiB on v7x (64 MiB).
    if vmem_limit_bytes is None:
        vmem_limit_bytes = int(min(48 * 1024 * 1024, (_vmem_capacity_bytes() * 5) // 8))

    # Conv as a single (2*HW, HW) matrix, built once on the host.
    t_bytes = 2 * HW * HW * 4
    if t_bytes > vmem_limit_bytes // 3:
        # TODO(synk): for very large H*W switch the dense O(HW^2) Toeplitz to a
        # banded per-row-block matmul (or 49 pltpu.roll taps); dense T would not
        # fit VMEM and would dominate traffic/FLOPs.
        raise NotImplementedError(
            f"dense conv-as-matmul matrix ({t_bytes} B) too large for VMEM "
            f"limit {vmem_limit_bytes} B; use a banded formulation for H*W={HW}")
    T2 = jnp.asarray(_conv_as_matrix(conv_weight, H, W))        # (2*HW, HW) f32

    # Tile sizing: in+out double-buffered tiles + intermediates must fit the limit.
    per_batch = C * HW * itemsize
    if 6 * per_batch + 2 * t_bytes > vmem_limit_bytes:
        raise ValueError(
            f"a single-batch tile ({per_batch} B) cannot fit the VMEM limit "
            f"{vmem_limit_bytes} B; reduce C*H*W or raise vmem_limit_bytes")
    budget = (vmem_limit_bytes - 2 * t_bytes) // 6              # ~8 MiB (v5e/v6e), ~6.5 MiB (v7x)

    if block_batch is not None:
        bt = max(1, min(int(block_batch), B))
    else:
        bt = max(1, min(B, budget // per_batch))
        # Only chips with 2 TensorCores benefit from >= 2 grid steps.
        if _num_tensorcores() >= 2 and B >= 2 and _cdiv(B, bt) < 2:
            bt = _cdiv(B, 2)
    grid = (_cdiv(B, bt),)

    x_flat = x.reshape(B, C, HW)                                # lane-dense view (free)

    def _call(single_buffer_t):
        t_kwargs = dict(pipeline_mode=pl.Buffered(1)) if single_buffer_t else {}
        return pl.pallas_call(
            _sa_kernel,
            out_shape=jax.ShapeDtypeStruct((B, C, HW), x.dtype),
            grid_spec=pltpu.PrefetchScalarGridSpec(
                num_scalar_prefetch=0,
                grid=grid,
                in_specs=[
                    # T: grid-invariant, single-buffered when supported.
                    pl.BlockSpec((2 * HW, HW), lambda b: (0, 0), **t_kwargs),
                    # x tile: batch-blocked, lane-dense HW on lanes.
                    pl.BlockSpec((bt, C, HW), lambda b: (b, 0, 0)),
                ],
                out_specs=pl.BlockSpec((bt, C, HW), lambda b: (b, 0, 0)),
            ),
            compiler_params=pltpu.CompilerParams(
                dimension_semantics=("parallel",),
                vmem_limit_bytes=vmem_limit_bytes,
            ),
        )(T2, x_flat)

    try:
        out_flat = _call(True)
    except Exception:
        # pipeline_mode=pl.Buffered(1) not supported on this jax version: fall
        # back to the default (double-buffered) spec for T.
        out_flat = _call(False)

    return out_flat.reshape(B, C, H, W)


def _reference(x, conv_weight):
    """Pure-JAX reference matching the PyTorch forward."""
    avg = jnp.mean(x, axis=1, keepdims=True)
    mx = jnp.max(x, axis=1, keepdims=True)
    cat = jnp.concatenate([avg, mx], axis=1)                     # (B, 2, H, W)
    K = conv_weight.shape[-1]
    w = jax.lax.conv_general_dilated(
        cat.astype(jnp.float32), conv_weight.astype(jnp.float32),
        window_strides=(1, 1), padding=[(K // 2, K // 2)] * 2,
        dimension_numbers=("NCHW", "OIHW", "NCHW"))
    gate = jax.nn.sigmoid(w)                                     # (B, 1, H, W)
    return (gate * x).astype(x.dtype)


if __name__ == "__main__":
    B, C, H, W, K = 2, 4, 16, 16, 7

    key = jax.random.PRNGKey(0)
    kx, kw = jax.random.split(key)
    x = jax.random.normal(kx, (B, C, H, W), dtype=jnp.float32)
    # Deterministic synthetic conv weight (nn.Conv2d(2, 1, 7, bias=False) shape).
    fan_in = 2 * K * K
    conv_weight = (jax.random.uniform(kw, (1, 2, K, K), dtype=jnp.float32) - 0.5) \
        * (2.0 / jnp.sqrt(fan_in))

    out = jax.block_until_ready(spatial_attention(x, conv_weight))

    ref = _reference(x, conv_weight)
    assert out.shape == (B, C, H, W)
    assert jnp.allclose(out, ref, atol=2e-5, rtol=2e-5), "mismatch vs reference"

    print("KERNEL_OK")
</pallas_src>

<mosaic_0001>
module attributes {stable_mosaic.version = 11 : i64} {
  func.func @_sa_kernel(%arg0: i32, %arg1: memref<512x256xf32, #tpu.memory_space<vmem>>, %arg2: memref<2x4x256xf32, #tpu.memory_space<vmem>>, %arg3: memref<2x4x256xf32, #tpu.memory_space<vmem>>) attributes {dimension_semantics = [#tpu.dimension_semantics<parallel>], iteration_bounds = array<i64: 1>, scalar_prefetch = 0 : i64, scratch_operands = 0 : i64, tpu.core_type = #tpu.core_type<tc>, window_params = [{pipeline_mode = #tpu.pipeline_mode<synchronous>, transform_indices = @transform_0, window_bounds = array<i64: 512, 256>}, {transform_indices = @transform_1, window_bounds = array<i64: 2, 4, 256>}, {transform_indices = @transform_2, window_bounds = array<i64: 2, 4, 256>}]} {
    %c0 = arith.constant 0 : index
    %c0_0 = arith.constant 0 : index
    %c0_1 = arith.constant 0 : index
    %0 = vector.load %arg2[%c0, %c0_0, %c0_1] : memref<2x4x256xf32, #tpu.memory_space<vmem>>, vector<2x4x256xf32>
    %cst = arith.constant dense<0.000000e+00> : vector<2x256xf32>
    %1 = vector.multi_reduction <add>, %0, %cst [1] : vector<2x4x256xf32> to vector<2x256xf32>
    %cst_2 = arith.constant 4.000000e+00 : f32
    %2 = vector.broadcast %cst_2 : f32 to vector<2x256xf32>
    %3 = arith.divf %1, %2 : vector<2x256xf32>
    %cst_3 = arith.constant dense<0xFF800000> : vector<2x256xf32>
    %4 = vector.multi_reduction <maximumf>, %0, %cst_3 [1] : vector<2x4x256xf32> to vector<2x256xf32>
    %5 = tpu.concatenate %3, %4 in 1 : vector<2x256xf32>, vector<2x256xf32> -> vector<2x512xf32>
    %c0_4 = arith.constant 0 : index
    %c0_5 = arith.constant 0 : index
    %6 = vector.load %arg1[%c0_4, %c0_5] : memref<512x256xf32, #tpu.memory_space<vmem>>, vector<512x256xf32>
    %cst_6 = arith.constant dense<0.000000e+00> : vector<2x256xf32>
    %7 = tpu.matmul %5, %6, %cst_6 {dimension_numbers = #tpu.dot_dimension_numbers<[1], [0], [0], [1], [0, 0, 1, 1], [], []>} : vector<2x512xf32>, vector<512x256xf32>, vector<2x256xf32> -> vector<2x256xf32>
    %8 = arith.negf %7 : vector<2x256xf32>
    %9 = math.exp %8 : vector<2x256xf32>
    %cst_7 = arith.constant 1.000000e+00 : f32
    %10 = vector.broadcast %cst_7 : f32 to vector<2x256xf32>
    %11 = arith.addf %10, %9 : vector<2x256xf32>
    %12 = arith.divf %10, %11 : vector<2x256xf32>
    %13 = vector.shape_cast %12 : vector<2x256xf32> to vector<2x1x256xf32>
    %14 = vector.broadcast %13 : vector<2x1x256xf32> to vector<2x4x256xf32>
    %15 = arith.mulf %14, %0 : vector<2x4x256xf32>
    %c0_8 = arith.constant 0 : index
    %c0_9 = arith.constant 0 : index
    %c0_10 = arith.constant 0 : index
    %16 = vector.load %arg3[%c0_8, %c0_9, %c0_10] : memref<2x4x256xf32, #tpu.memory_space<vmem>>, vector<2x4x256xf32>
    tpu.vector_store %arg3[%c0_8, %c0_9, %c0_10], %15 {strides = array<i32>} : memref<2x4x256xf32, #tpu.memory_space<vmem>>, vector<2x4x256xf32>,
    return
  }
  func.func @transform_0(%arg0: i32) -> (i32, i32) {
    %c0_i32 = arith.constant 0 : i32
    %c0_i32_0 = arith.constant 0 : i32
    %c0_i32_1 = arith.constant 0 : i32
    return %c0_i32, %c0_i32_0 : i32, i32
  }
  func.func @transform_1(%arg0: i32) -> (i32, i32, i32) {
    %c0_i32 = arith.constant 0 : i32
    %c0_i32_0 = arith.constant 0 : i32
    %c0_i32_1 = arith.constant 0 : i32
    return %arg0, %c0_i32, %c0_i32_0 : i32, i32, i32
  }
  func.func @transform_2(%arg0: i32) -> (i32, i32, i32) {
    %c0_i32 = arith.constant 0 : i32
    %c0_i32_0 = arith.constant 0 : i32
    %c0_i32_1 = arith.constant 0 : i32
    return %arg0, %c0_i32, %c0_i32_0 : i32, i32, i32
  }
}

module attributes {stable_mosaic.version = 11 : i64} {
  func.func @_sa_kernel(%arg0: i32, %arg1: memref<512x256xf32, #tpu.memory_space<vmem>>, %arg2: memref<2x4x256xf32, #tpu.memory_space<vmem>>, %arg3: memref<2x4x256xf32, #tpu.memory_space<vmem>>) attributes {dimension_semantics = [#tpu.dimension_semantics<parallel>], iteration_bounds = array<i64: 1>, scalar_prefetch = 0 : i64, scratch_operands = 0 : i64, tpu.core_type = #tpu.core_type<tc>, window_params = [{pipeline_mode = #tpu.pipeline_mode<synchronous>, transform_indices = @transform_0, window_bounds = array<i64: 512, 256>}, {transform_indices = @transform_1, window_bounds = array<i64: 2, 4, 256>}, {transform_indices = @transform_2, window_bounds = array<i64: 2, 4, 256>}]} {
    %c0 = arith.constant 0 : index
    %c0_0 = arith.constant 0 : index
    %c0_1 = arith.constant 0 : index
    %0 = vector.load %arg2[%c0, %c0_0, %c0_1] : memref<2x4x256xf32, #tpu.memory_space<vmem>>, vector<2x4x256xf32>
    %cst = arith.constant dense<0.000000e+00> : vector<2x256xf32>
    %1 = vector.multi_reduction <add>, %0, %cst [1] : vector<2x4x256xf32> to vector<2x256xf32>
    %cst_2 = arith.constant 4.000000e+00 : f32
    %2 = vector.broadcast %cst_2 : f32 to vector<2x256xf32>
    %3 = arith.divf %1, %2 : vector<2x256xf32>
    %cst_3 = arith.constant dense<0xFF800000> : vector<2x256xf32>
    %4 = vector.multi_reduction <maximumf>, %0, %cst_3 [1] : vector<2x4x256xf32> to vector<2x256xf32>
    %5 = tpu.concatenate %3, %4 in 1 : vector<2x256xf32>, vector<2x256xf32> -> vector<2x512xf32>
    %c0_4 = arith.constant 0 : index
    %c0_5 = arith.constant 0 : index
    %6 = vector.load %arg1[%c0_4, %c0_5] : memref<512x256xf32, #tpu.memory_space<vmem>>, vector<512x256xf32>
    %cst_6 = arith.constant dense<0.000000e+00> : vector<2x256xf32>
    %7 = tpu.matmul %5, %6, %cst_6 {dimension_numbers = #tpu.dot_dimension_numbers<[1], [0], [0], [1], [0, 0, 1, 1], [], []>} : vector<2x512xf32>, vector<512x256xf32>, vector<2x256xf32> -> vector<2x256xf32>
    %8 = arith.negf %7 : vector<2x256xf32>
    %9 = math.exp %8 : vector<2x256xf32>
    %cst_7 = arith.constant 1.000000e+00 : f32
    %10 = vector.broadcast %cst_7 : f32 to vector<2x256xf32>
    %11 = arith.addf %10, %9 : vector<2x256xf32>
    %12 = arith.divf %10, %11 : vector<2x256xf32>
    %13 = vector.shape_cast %12 : vector<2x256xf32> to vector<2x1x256xf32>
    %14 = vector.broadcast %13 : vector<2x1x256xf32> to vector<2x4x256xf32>
    %15 = arith.mulf %14, %0 : vector<2x4x256xf32>
    %c0_8 = arith.constant 0 : index
    %c0_9 = arith.constant 0 : index
    %c0_10 = arith.constant 0 : index
    %16 = vector.load %arg3[%c0_8, %c0_9, %c0_10] : memref<2x4x256xf32, #tpu.memory_space<vmem>>, vector<2x4x256xf32>
    tpu.vector_store %arg3[%c0_8, %c0_9, %c0_10], %15 {strides = array<i32>} : memref<2x4x256xf32, #tpu.memory_space<vmem>>, vector<2x4x256xf32>,
    return
  }
  func.func @transform_0(%arg0: i32) -> (i32, i32) {
    %c0_i32 = arith.constant 0 : i32
    %c0_i32_0 = arith.constant 0 : i32
    %c0_i32_1 = arith.constant 0 : i32
    return %c0_i32, %c0_i32_0 : i32, i32
  }
  func.func @transform_1(%arg0: i32) -> (i32, i32, i32) {
    %c0_i32 = arith.constant 0 : i32
    %c0_i32_0 = arith.constant 0 : i32
    %c0_i32_1 = arith.constant 0 : i32
    return %arg0, %c0_i32, %c0_i32_0 : i32, i32, i32
  }
  func.func @transform_2(%arg0: i32) -> (i32, i32, i32) {
    %c0_i32 = arith.constant 0 : i32
    %c0_i32_0 = arith.constant 0 : i32
    %c0_i32_1 = arith.constant 0 : i32
    return %arg0, %c0_i32, %c0_i32_0 : i32, i32, i32
  }
}

</mosaic_0001>

<llo_original>
// kernel: tpu_custom_call.1
$region0: #{tpu_custom_call.1}
  #allocation0 [shape = 'u32[]', space=smem, size = 0x4, offset = 0x4, fixed_abs, tag = 'smem constant byte address 0x4 - core index']
  #allocation1 [shape = 'u32[144,128]{1,0:T(1,128)}', space=vmem, size = 0x12000, scoped, tag = 'internal scratch']
  %s0 = inlined_call_operand.hbm [shape: f32[512,256], index: 0, kind: input, shape index: {}]
  %s1 = inlined_call_operand.hbm [shape: f32[2,4,256], index: 1, kind: input, shape index: {}]
  %s2 = inlined_call_operand.hbm [shape: f32[2,4,256], index: 2, kind: output, shape index: {}]
  %s3 = sld [smem:[#allocation0]]
  $region26: #{tpu_custom_call.1} parent=0
    _
  %s5 = ssub.s32 1, %s3
  %s6 = scalar_select 0, %s5, %s3
  $region1: #{tpu_custom_call.1} parent=0
    #allocation2 [shape = 'u8[524288]{0}', space=vmem, size = 0x80000, scoped, tag = 'input window, operand 0, single buffered']
    #allocation3 [shape = 's32[1]{0}', space=sflag, size = 0x4, scoped, tag = 'scoped memory for tpu_custom_call.1']
    #allocation4 [shape = 's32[1]{0}', space=sflag, size = 0x4, scoped, tag = 'scoped memory for tpu_custom_call.1']
    #allocation5 [shape = 'u8[8192]{0}', space=vmem, size = 0x2000, scoped, tag = 'input window, operand 1, single buffered']
    #allocation6 [shape = 's32[1]{0}', space=sflag, size = 0x4, scoped, tag = 'scoped memory for tpu_custom_call.1']
    #allocation7 [shape = 'u8[8192]{0}', space=vmem, size = 0x2000, scoped, tag = 'output window, operand 0, single buffered']
    %7 = vsyncpa [#allocation3], 0
    %8 = vsyncpa [#allocation6], 0
    %9 = vsyncpa [#allocation4], 0
    // Predicated region
    $region2: #{tpu_custom_call.1} parent=1 // pred_check
      _
    $region3: #{tpu_custom_call.1} parent=1 // pred_check_branch
      %11 = sbr.rel (0) target = $region5
    $region4: #{tpu_custom_call.1} parent=1 // pred_region
      %s13 = ssub.s32 16384, 16384
      %14 = vsyncadd [#allocation3], %s13
      %s15 = sshll.u32 [#allocation2], 4
      %s16 = int_to_ptr.vmem [resolvable:$true] %s15
      %21 = dma.hbm_to_vmem [thread:$0]  %s0, 16384, %s16, [#allocation3], 256, 256, 16
    $region5: #{tpu_custom_call.1} parent=1 // pred_fallthru
      _
    // Predicated region
    $region6: #{tpu_custom_call.1} parent=1 // pred_check
      _
    $region7: #{tpu_custom_call.1} parent=1 // pred_check_branch
      %23 = sbr.rel (0) target = $region9
    $region8: #{tpu_custom_call.1} parent=1 // pred_region
      %s25 = ssub.s32 256, 256
      %26 = vsyncadd [#allocation6], %s25
      %s27 = sshll.u32 [#allocation5], 4
      %s28 = int_to_ptr.vmem [resolvable:$true] %s27
      %33 = dma.hbm_to_vmem [thread:$0]  %s1, 256, %s28, [#allocation6], 128, 128, 8
    $region9: #{tpu_custom_call.1} parent=1 // pred_fallthru
      _
    // Predicated region
    $region10: #{tpu_custom_call.1} parent=1 // pred_check
      _
    $region11: #{tpu_custom_call.1} parent=1 // pred_check_branch
      %35 = sbr.rel (0) target = $region13
    $region12: #{tpu_custom_call.1} parent=1 // pred_region
      %36 = dma.done [#allocation3], 16384
    $region13: #{tpu_custom_call.1} parent=1 // pred_fallthru
      _
    // Predicated region
    $region14: #{tpu_custom_call.1} parent=1 // pred_check
      _
    $region15: #{tpu_custom_call.1} parent=1 // pred_check_branch
      %38 = sbr.rel (0) target = $region17
    $region16: #{tpu_custom_call.1} parent=1 // pred_region
      %39 = dma.done [#allocation6], 256
    $region17: #{tpu_custom_call.1} parent=1 // pred_fallthru
      _
    %v40 = vld [vmem:[#allocation5] sm:$0xff]
    %v41 = vld [vmem:[#allocation5 + $0x8] sm:$0xff]
    %v44 = vcombine.high %v40, %v40
    %v45 = vcombine.high %v41, %v41
    %vm48 = vcmask 1043456
    %v49 = vsel %vm48, %v40, 0.0
    %v50 = vrot.slane %v49, 4
    %v51 = vadd.f32 %v49, %v50
    %v52 = vrot.slane %v51, 2
    %v53 = vadd.f32 %v51, %v52
    %v54 = vrot.slane %v53, 1
    %v55 = vadd.f32 %v53, %v54
    %v56 = vsel %vm48, %v44, 0.0
    %v57 = vrot.slane %v56, 4
    %v58 = vadd.f32 %v56, %v57
    %v59 = vrot.slane %v58, 2
    %v60 = vadd.f32 %v58, %v59
    %v61 = vrot.slane %v60, 1
    %v62 = vadd.f32 %v60, %v61
    %v63 = vsel %vm48, %v41, 0.0
    %v64 = vrot.slane %v63, 4
    %v65 = vadd.f32 %v63, %v64
    %v66 = vrot.slane %v65, 2
    %v67 = vadd.f32 %v65, %v66
    %v68 = vrot.slane %v67, 1
    %v69 = vadd.f32 %v67, %v68
    %v70 = vsel %vm48, %v45, 0.0
    %v71 = vrot.slane %v70, 4
    %v72 = vadd.f32 %v70, %v71
    %v73 = vrot.slane %v72, 2
    %v74 = vadd.f32 %v72, %v73
    %v75 = vrot.slane %v74, 1
    %v76 = vadd.f32 %v74, %v75
    %v77 = vrcp.pop 4.0
    %v78 = vmul.f32 %v55, %v77
    %v79 = vmul.f32 %v62, %v77
    %v80 = vmul.f32 %v69, %v77
    %v81 = vmul.f32 %v76, %v77
    %v82 = vsel %vm48, %v40, -inf
    %v83 = vrot.slane %v82, 4
    %v84 = vmax.f32 %v82, %v83
    %v85 = vrot.slane %v84, 2
    %v86 = vmax.f32 %v84, %v85
    %v87 = vrot.slane %v86, 1
    %v88 = vmax.f32 %v86, %v87
    %v89 = vsel %vm48, %v44, -inf
    %v90 = vrot.slane %v89, 4
    %v91 = vmax.f32 %v89, %v90
    %v92 = vrot.slane %v91, 2
    %v93 = vmax.f32 %v91, %v92
    %v94 = vrot.slane %v93, 1
    %v95 = vmax.f32 %v93, %v94
    %v96 = vsel %vm48, %v41, -inf
    %v97 = vrot.slane %v96, 4
    %v98 = vmax.f32 %v96, %v97
    %v99 = vrot.slane %v98, 2
    %v100 = vmax.f32 %v98, %v99
    %v101 = vrot.slane %v100, 1
    %v102 = vmax.f32 %v100, %v101
    %v103 = vsel %vm48, %v45, -inf
    %v104 = vrot.slane %v103, 4
    %v105 = vmax.f32 %v103, %v104
    %v106 = vrot.slane %v105, 2
    %v107 = vmax.f32 %v105, %v106
    %v108 = vrot.slane %v107, 1
    %v109 = vmax.f32 %v107, %v108
    %vm114 = vcmask 1041409
    %v115 = vsel %vm114, %v80, %v78
    %v116 = vsel %vm114, %v81, %v79
    %v123 = vsel %vm114, %v102, %v88
    %v124 = vsel %vm114, %v109, %v95
    %v127 = vld [vmem:[#allocation2] sm:$0xff]
    %v128 = vld [vmem:[#allocation2 + $0x8] sm:$0xff]
    %v129 = vld [vmem:[#allocation2 + $0x10] sm:$0xff]
    %v130 = vld [vmem:[#allocation2 + $0x18] sm:$0xff]
    %v131 = vld [vmem:[#allocation2 + $0x20] sm:$0xff]
    %v132 = vld [vmem:[#allocation2 + $0x28] sm:$0xff]
    %v133 = vld [vmem:[#allocation2 + $0x30] sm:$0xff]
    %v134 = vld [vmem:[#allocation2 + $0x38] sm:$0xff]
    %v135 = vld [vmem:[#allocation2 + $0x40] sm:$0xff]
    %v136 = vld [vmem:[#allocation2 + $0x48] sm:$0xff]
    %v137 = vld [vmem:[#allocation2 + $0x50] sm:$0xff]
    %v138 = vld [vmem:[#allocation2 + $0x58] sm:$0xff]
    %v139 = vld [vmem:[#allocation2 + $0x60] sm:$0xff]
    %v140 = vld [vmem:[#allocation2 + $0x68] sm:$0xff]
    %v141 = vld [vmem:[#allocation2 + $0x70] sm:$0xff]
    %v142 = vld [vmem:[#allocation2 + $0x78] sm:$0xff]
    %v143 = vld [vmem:[#allocation2 + $0x80] sm:$0xff]
    %v144 = vld [vmem:[#allocation2 + $0x88] sm:$0xff]
    %v145 = vld [vmem:[#allocation2 + $0x90] sm:$0xff]
    %v146 = vld [vmem:[#allocation2 + $0x98] sm:$0xff]
    %v147 = vld [vmem:[#allocation2 + $0xa0] sm:$0xff]
    %v148 = vld [vmem:[#allocation2 + $0xa8] sm:$0xff]
    %v149 = vld [vmem:[#allocation2 + $0xb0] sm:$0xff]
    %v150 = vld [vmem:[#allocation2 + $0xb8] sm:$0xff]
    %v151 = vld [vmem:[#allocation2 + $0xc0] sm:$0xff]
    %v152 = vld [vmem:[#allocation2 + $0xc8] sm:$0xff]
    %v153 = vld [vmem:[#allocation2 + $0xd0] sm:$0xff]
    %v154 = vld [vmem:[#allocation2 + $0xd8] sm:$0xff]
    %v155 = vld [vmem:[#allocation2 + $0xe0] sm:$0xff]
    %v156 = vld [vmem:[#allocation2 + $0xe8] sm:$0xff]
    %v157 = vld [vmem:[#allocation2 + $0xf0] sm:$0xff]
    %v158 = vld [vmem:[#allocation2 + $0xf8] sm:$0xff]
    %v159 = vld [vmem:[#allocation2 + $0x100] sm:$0xff]
    %v160 = vld [vmem:[#allocation2 + $0x108] sm:$0xff]
    %v161 = vld [vmem:[#allocation2 + $0x110] sm:$0xff]
    %v162 = vld [vmem:[#allocation2 + $0x118] sm:$0xff]
    %v163 = vld [vmem:[#allocation2 + $0x120] sm:$0xff]
    %v164 = vld [vmem:[#allocation2 + $0x128] sm:$0xff]
    %v165 = vld [vmem:[#allocation2 + $0x130] sm:$0xff]
    %v166 = vld [vmem:[#allocation2 + $0x138] sm:$0xff]
    %v167 = vld [vmem:[#allocation2 + $0x140] sm:$0xff]
    %v168 = vld [vmem:[#allocation2 + $0x148] sm:$0xff]
    %v169 = vld [vmem:[#allocation2 + $0x150] sm:$0xff]
    %v170 = vld [vmem:[#allocation2 + $0x158] sm:$0xff]
    %v171 = vld [vmem:[#allocation2 + $0x160] sm:$0xff]
    %v172 = vld [vmem:[#allocation2 + $0x168] sm:$0xff]
    %v173 = vld [vmem:[#allocation2 + $0x170] sm:$0xff]
    %v174 = vld [vmem:[#allocation2 + $0x178] sm:$0xff]
    %v175 = vld [vmem:[#allocation2 + $0x180] sm:$0xff]
    %v176 = vld [vmem:[#allocation2 + $0x188] sm:$0xff]
    %v177 = vld [vmem:[#allocation2 + $0x190] sm:$0xff]
    %v178 = vld [vmem:[#allocation2 + $0x198] sm:$0xff]
    %v179 = vld [vmem:[#allocation2 + $0x1a0] sm:$0xff]
    %v180 = vld [vmem:[#allocation2 + $0x1a8] sm:$0xff]
    %v181 = vld [vmem:[#allocation2 + $0x1b0] sm:$0xff]
    %v182 = vld [vmem:[#allocation2 + $0x1b8] sm:$0xff]
    %v183 = vld [vmem:[#allocation2 + $0x1c0] sm:$0xff]
    %v184 = vld [vmem:[#allocation2 + $0x1c8] sm:$0xff]
    %v185 = vld [vmem:[#allocation2 + $0x1d0] sm:$0xff]
    %v186 = vld [vmem:[#allocation2 + $0x1d8] sm:$0xff]
    %v187 = vld [vmem:[#allocation2 + $0x1e0] sm:$0xff]
    %v188 = vld [vmem:[#allocation2 + $0x1e8] sm:$0xff]
    %v189 = vld [vmem:[#allocation2 + $0x1f0] sm:$0xff]
    %v190 = vld [vmem:[#allocation2 + $0x1f8] sm:$0xff]
    %v191 = vld [vmem:[#allocation2 + $0x200] sm:$0xff]
    %v192 = vld [vmem:[#allocation2 + $0x208] sm:$0xff]
    %v193 = vld [vmem:[#allocation2 + $0x210] sm:$0xff]
    %v194 = vld [vmem:[#allocation2 + $0x218] sm:$0xff]
    %v195 = vld [vmem:[#allocation2 + $0x220] sm:$0xff]
    %v196 = vld [vmem:[#allocation2 + $0x228] sm:$0xff]
    %v197 = vld [vmem:[#allocation2 + $0x230] sm:$0xff]
    %v198 = vld [vmem:[#allocation2 + $0x238] sm:$0xff]
    %v199 = vld [vmem:[#allocation2 + $0x240] sm:$0xff]
    %v200 = vld [vmem:[#allocation2 + $0x248] sm:$0xff]
    %v201 = vld [vmem:[#allocation2 + $0x250] sm:$0xff]
    %v202 = vld [vmem:[#allocation2 + $0x258] sm:$0xff]
    %v203 = vld [vmem:[#allocation2 + $0x260] sm:$0xff]
    %v204 = vld [vmem:[#allocation2 + $0x268] sm:$0xff]
    %v205 = vld [vmem:[#allocation2 + $0x270] sm:$0xff]
    %v206 = vld [vmem:[#allocation2 + $0x278] sm:$0xff]
    %v207 = vld [vmem:[#allocation2 + $0x280] sm:$0xff]
    %v208 = vld [vmem:[#allocation2 + $0x288] sm:$0xff]
    %v209 = vld [vmem:[#allocation2 + $0x290] sm:$0xff]
    %v210 = vld [vmem:[#allocation2 + $0x298] sm:$0xff]
    %v211 = vld [vmem:[#allocation2 + $0x2a0] sm:$0xff]
    %v212 = vld [vmem:[#allocation2 + $0x2a8] sm:$0xff]
    %v213 = vld [vmem:[#allocation2 + $0x2b0] sm:$0xff]
    %v214 = vld [vmem:[#allocation2 + $0x2b8] sm:$0xff]
    %v215 = vld [vmem:[#allocation2 + $0x2c0] sm:$0xff]
    %v216 = vld [vmem:[#allocation2 + $0x2c8] sm:$0xff]
    %v217 = vld [vmem:[#allocation2 + $0x2d0] sm:$0xff]
    %v218 = vld [vmem:[#allocation2 + $0x2d8] sm:$0xff]
    %v219 = vld [vmem:[#allocation2 + $0x2e0] sm:$0xff]
    %v220 = vld [vmem:[#allocation2 + $0x2e8] sm:$0xff]
    %v221 = vld [vmem:[#allocation2 + $0x2f0] sm:$0xff]
    %v222 = vld [vmem:[#allocation2 + $0x2f8] sm:$0xff]
    %v223 = vld [vmem:[#allocation2 + $0x300] sm:$0xff]
    %v224 = vld [vmem:[#allocation2 + $0x308] sm:$0xff]
    %v225 = vld [vmem:[#allocation2 + $0x310] sm:$0xff]
    %v226 = vld [vmem:[#allocation2 + $0x318] sm:$0xff]
    %v227 = vld [vmem:[#allocation2 + $0x320] sm:$0xff]
    %v228 = vld [vmem:[#allocation2 + $0x328] sm:$0xff]
    %v229 = vld [vmem:[#allocation2 + $0x330] sm:$0xff]
    %v230 = vld [vmem:[#allocation2 + $0x338] sm:$0xff]
    %v231 = vld [vmem:[#allocation2 + $0x340] sm:$0xff]
    %v232 = vld [vmem:[#allocation2 + $0x348] sm:$0xff]
    %v233 = vld [vmem:[#allocation2 + $0x350] sm:$0xff]
    %v234 = vld [vmem:[#allocation2 + $0x358] sm:$0xff]
    %v235 = vld [vmem:[#allocation2 + $0x360] sm:$0xff]
    %v236 = vld [vmem:[#allocation2 + $0x368] sm:$0xff]
    %v237 = vld [vmem:[#allocation2 + $0x370] sm:$0xff]
    %v238 = vld [vmem:[#allocation2 + $0x378] sm:$0xff]
    %v239 = vld [vmem:[#allocation2 + $0x380] sm:$0xff]
    %v240 = vld [vmem:[#allocation2 + $0x388] sm:$0xff]
    %v241 = vld [vmem:[#allocation2 + $0x390] sm:$0xff]
    %v242 = vld [vmem:[#allocation2 + $0x398] sm:$0xff]
    %v243 = vld [vmem:[#allocation2 + $0x3a0] sm:$0xff]
    %v244 = vld [vmem:[#allocation2 + $0x3a8] sm:$0xff]
    %v245 = vld [vmem:[#allocation2 + $0x3b0] sm:$0xff]
    %v246 = vld [vmem:[#allocation2 + $0x3b8] sm:$0xff]
    %v247 = vld [vmem:[#allocation2 + $0x3c0] sm:$0xff]
    %v248 = vld [vmem:[#allocation2 + $0x3c8] sm:$0xff]
    %v249 = vld [vmem:[#allocation2 + $0x3d0] sm:$0xff]
    %v250 = vld [vmem:[#allocation2 + $0x3d8] sm:$0xff]
    %v251 = vld [vmem:[#allocation2 + $0x3e0] sm:$0xff]
    %v252 = vld [vmem:[#allocation2 + $0x3e8] sm:$0xff]
    %v253 = vld [vmem:[#allocation2 + $0x3f0] sm:$0xff]
    %v254 = vld [vmem:[#allocation2 + $0x3f8] sm:$0xff]
    %255 = vmatprep.subr.mxu0 %v158
    %256 = vmatpush1.msra.mxu0 %v157
    %257 = vmatprep.subr.mxu0 %v156
    %258 = vmatpush1.msra.mxu0 %v155
    %259 = vmatprep.subr.mxu0 %v154
    %260 = vmatpush1.msra.mxu0 %v153
    %261 = vmatprep.subr.mxu0 %v152
    %262 = vmatpush1.msra.mxu0 %v151
    %263 = vmatprep.subr.mxu0 %v150
    %264 = vmatpush1.msra.mxu0 %v149
    %265 = vmatprep.subr.mxu0 %v148
    %266 = vmatpush1.msra.mxu0 %v147
    %267 = vmatprep.subr.mxu0 %v146
    %268 = vmatpush1.msra.mxu0 %v145
    %269 = vmatprep.subr.mxu0 %v144
    %270 = vmatpush1.msra.mxu0 %v143
    %271 = vmatprep.subr.mxu0 %v142
    %272 = vmatpush1.msra.mxu0 %v141
    %273 = vmatprep.subr.mxu0 %v140
    %274 = vmatpush1.msra.mxu0 %v139
    %275 = vmatprep.subr.mxu0 %v138
    %276 = vmatpush1.msra.mxu0 %v137
    %277 = vmatprep.subr.mxu0 %v136
    %278 = vmatpush1.msra.mxu0 %v135
    %279 = vmatprep.subr.mxu0 %v134
    %280 = vmatpush1.msra.mxu0 %v133
    %281 = vmatprep.subr.mxu0 %v132
    %282 = vmatpush1.msra.mxu0 %v131
    %283 = vmatprep.subr.mxu0 %v130
    %284 = vmatpush1.msra.mxu0 %v129
    %285 = vmatprep.subr.mxu0 %v128
    %286 = vmatpush1.msra.mxu0 %v127
    %287 = vmatprep.subr.mxu0 %v190
    %288 = vmatpush2.msra.mxu0 %v189
    %289 = vmatprep.subr.mxu0 %v188
    %290 = vmatpush2.msra.mxu0 %v187
    %291 = vmatprep.subr.mxu0 %v186
    %292 = vmatpush2.msra.mxu0 %v185
    %293 = vmatprep.subr.mxu0 %v184
    %294 = vmatpush2.msra.mxu0 %v183
    %295 = vmatprep.subr.mxu0 %v182
    %296 = vmatpush2.msra.mxu0 %v181
    %297 = vmatprep.subr.mxu0 %v180
    %298 = vmatpush2.msra.mxu0 %v179
    %299 = vmatprep.subr.mxu0 %v178
    %300 = vmatpush2.msra.mxu0 %v177
    %301 = vmatprep.subr.mxu0 %v176
    %302 = vmatpush2.msra.mxu0 %v175
    %303 = vmatprep.subr.mxu0 %v174
    %304 = vmatpush2.msra.mxu0 %v173
    %305 = vmatprep.subr.mxu0 %v172
    %306 = vmatpush2.msra.mxu0 %v171
    %307 = vmatprep.subr.mxu0 %v170
    %308 = vmatpush2.msra.mxu0 %v169
    %309 = vmatprep.subr.mxu0 %v168
    %310 = vmatpush2.msra.mxu0 %v167
    %311 = vmatprep.subr.mxu0 %v166
    %312 = vmatpush2.msra.mxu0 %v165
    %313 = vmatprep.subr.mxu0 %v164
    %314 = vmatpush2.msra.mxu0 %v163
    %315 = vmatprep.subr.mxu0 %v162
    %316 = vmatpush2.msra.mxu0 %v161
    %317 = vmatprep.subr.mxu0 %v160
    %318 = vmatpush2.msra.mxu0 %v159
    %319 = vmatprep.mubr.f32.mxu0 %v116
    %320 = vmatmul.mubr.f32.gmra.mxu0 %v115
    %v321 = vpop.f32.mrf.mxu0
    %v322 = vadd.f32 0.0, %v321
    %v323 = vpop.f32.mrf.mxu0
    %v324 = vadd.f32 0.0, %v323
    %325 = vdwg.mxu0
    %326 = vmatprep.subr.mxu0 %v222
    %327 = vmatpush1.msra.mxu0 %v221
    %328 = vmatprep.subr.mxu0 %v220
    %329 = vmatpush1.msra.mxu0 %v219
    %330 = vmatprep.subr.mxu0 %v218
    %331 = vmatpush1.msra.mxu0 %v217
    %332 = vmatprep.subr.mxu0 %v216
    %333 = vmatpush1.msra.mxu0 %v215
    %334 = vmatprep.subr.mxu0 %v214
    %335 = vmatpush1.msra.mxu0 %v213
    %336 = vmatprep.subr.mxu0 %v212
    %337 = vmatpush1.msra.mxu0 %v211
    %338 = vmatprep.subr.mxu0 %v210
    %339 = vmatpush1.msra.mxu0 %v209
    %340 = vmatprep.subr.mxu0 %v208
    %341 = vmatpush1.msra.mxu0 %v207
    %342 = vmatprep.subr.mxu0 %v206
    %343 = vmatpush1.msra.mxu0 %v205
    %344 = vmatprep.subr.mxu0 %v204
    %345 = vmatpush1.msra.mxu0 %v203
    %346 = vmatprep.subr.mxu0 %v202
    %347 = vmatpush1.msra.mxu0 %v201
    %348 = vmatprep.subr.mxu0 %v200
    %349 = vmatpush1.msra.mxu0 %v199
    %350 = vmatprep.subr.mxu0 %v198
    %351 = vmatpush1.msra.mxu0 %v197
    %352 = vmatprep.subr.mxu0 %v196
    %353 = vmatpush1.msra.mxu0 %v195
    %354 = vmatprep.subr.mxu0 %v194
    %355 = vmatpush1.msra.mxu0 %v193
    %356 = vmatprep.subr.mxu0 %v192
    %357 = vmatpush1.msra.mxu0 %v191
    %358 = vmatprep.subr.mxu0 %v254
    %359 = vmatpush2.msra.mxu0 %v253
    %360 = vmatprep.subr.mxu0 %v252
    %361 = vmatpush2.msra.mxu0 %v251
    %362 = vmatprep.subr.mxu0 %v250
    %363 = vmatpush2.msra.mxu0 %v249
    %364 = vmatprep.subr.mxu0 %v248
    %365 = vmatpush2.msra.mxu0 %v247
    %366 = vmatprep.subr.mxu0 %v246
    %367 = vmatpush2.msra.mxu0 %v245
    %368 = vmatprep.subr.mxu0 %v244
    %369 = vmatpush2.msra.mxu0 %v243
    %370 = vmatprep.subr.mxu0 %v242
    %371 = vmatpush2.msra.mxu0 %v241
    %372 = vmatprep.subr.mxu0 %v240
    %373 = vmatpush2.msra.mxu0 %v239
    %374 = vmatprep.subr.mxu0 %v238
    %375 = vmatpush2.msra.mxu0 %v237
    %376 = vmatprep.subr.mxu0 %v236
    %377 = vmatpush2.msra.mxu0 %v235
    %378 = vmatprep.subr.mxu0 %v234
    %379 = vmatpush2.msra.mxu0 %v233
    %380 = vmatprep.subr.mxu0 %v232
    %381 = vmatpush2.msra.mxu0 %v231
    %382 = vmatprep.subr.mxu0 %v230
    %383 = vmatpush2.msra.mxu0 %v229
    %384 = vmatprep.subr.mxu0 %v228
    %385 = vmatpush2.msra.mxu0 %v227
    %386 = vmatprep.subr.mxu0 %v226
    %387 = vmatpush2.msra.mxu0 %v225
    %388 = vmatprep.subr.mxu0 %v224
    %389 = vmatpush2.msra.mxu0 %v223
    %390 = vmatprep.mubr.f32.mxu0 %v124
    %391 = vmatmul.mubr.f32.gmra.mxu0 %v123
    %v392 = vpop.f32.mrf.mxu0
    %v393 = vadd.f32 %v322, %v392
    %v394 = vpop.f32.mrf.mxu0
    %v395 = vadd.f32 %v324, %v394
    %396 = vdwg.mxu0
    %v397 = vxor.u32 %v393, 2147483648
    %v398 = vxor.u32 %v395, 2147483648
    %v399 = vmul.f32 %v397, 1.442695
    %v400 = vpow.pop %v399
    %v401 = vmul.f32 %v398, 1.442695
    %v402 = vpow.pop %v401
    %v403 = vadd.f32 %v400, 1.0
    %v404 = vadd.f32 %v402, 1.0
    %v405 = vrcp.pop %v403
    %v406 = vmul.f32 1.0, %v405
    %v407 = vrcp.pop %v404
    %v408 = vmul.f32 1.0, %v407
    %v411 = vcombine.low %v406, %v408
    %v413 = vunpack.c.l.s4 1966171168
    %v414 = vunpack.c.0.s8 %v413
    %v415 = vlaneseq
    %v416 = vshrl.u32 %v415, 7
    %v417 = vsub.s32 %v414, %v416
    %v418 = vrot.slane %v411, %v417
    %v419 = vcombine.high %v418, %v418
    %v421 = vunpack.c.l.s4 1966171168
    %v422 = vunpack.c.0.s8 %v421
    %v423 = vlaneseq
    %v424 = vshrl.u32 %v423, 7
    %v425 = vsub.s32 %v422, %v424
    %v426 = vrot.slane %v418, %v425
    %v428 = vunpack.c.l.s4 1966171168
    %v429 = vunpack.c.0.s8 %v428
    %v430 = vlaneseq
    %v431 = vshrl.u32 %v430, 7
    %v432 = vsub.s32 %v429, %v431
    %v433 = vrot.slane %v419, %v432
    %v434 = vlaneseq
    %v435 = vshrl.u32 %v434, 7
    %v436 = vsub.s32 0, %v435
    %v437 = vrot.slane %v426, %v436
    %v438 = vlaneseq
    %v439 = vshrl.u32 %v438, 7
    %v440 = vsub.s32 1, %v439
    %v441 = vrot.slane %v426, %v440
    %v442 = vlaneseq
    %v443 = vshrl.u32 %v442, 7
    %v444 = vsub.s32 0, %v443
    %v445 = vrot.slane %v433, %v444
    %v446 = vlaneseq
    %v447 = vshrl.u32 %v446, 7
    %v448 = vsub.s32 1, %v447
    %v449 = vrot.slane %v433, %v448
    %v454 = vmul.f32 %v437, %v40
    %v455 = vmul.f32 %v441, %v44
    %v456 = vmul.f32 %v445, %v41
    %v457 = vmul.f32 %v449, %v45
    %v462 = vcombine.low %v454, %v455
    %v463 = vcombine.low %v456, %v457
    %466 = vst [vmem:[#allocation7] sm:$0xff] %v462
    %467 = vst [vmem:[#allocation7 + $0x8] sm:$0xff] %v463
    // Predicated region
    $region18: #{tpu_custom_call.1} parent=1 // pred_check
      _
    $region19: #{tpu_custom_call.1} parent=1 // pred_check_branch
      %469 = sbr.rel (0) target = $region21
    $region20: #{tpu_custom_call.1} parent=1 // pred_region
      %s471 = ssub.s32 256, 256
      %472 = vsyncadd [#allocation4], %s471
      %s473 = sshll.u32 [#allocation7], 4
      %s474 = int_to_ptr.vmem [resolvable:$true] %s473
      %479 = dma.vmem_to_hbm [thread:$0]  %s474, 256, %s2, [#allocation4], 128, 128, 8
    $region21: #{tpu_custom_call.1} parent=1 // pred_fallthru
      _
    // Predicated region
    $region22: #{tpu_custom_call.1} parent=1 // pred_check
      _
    $region23: #{tpu_custom_call.1} parent=1 // pred_check_branch
      %481 = sbr.rel (0) target = $region25
    $region24: #{tpu_custom_call.1} parent=1 // pred_region
      %482 = dma.done [#allocation4], 256
    $region25: #{tpu_custom_call.1} parent=1 // pred_fallthru
      _
    %483 = vsyncpa [#allocation3], 1
    %484 = vsyncpa [#allocation6], 1
    %485 = vsyncpa [#allocation4], 1

// kernel: tpu_custom_call.1
$region0: #{tpu_custom_call.1}
  #allocation0 [shape = 'u32[]', space=smem, size = 0x4, offset = 0x4, fixed_abs, tag = 'smem constant byte address 0x4 - core index']
  #allocation1 [shape = 'u32[144,128]{1,0:T(1,128)}', space=vmem, size = 0x12000, scoped, tag = 'internal scratch']
  %s0 = inlined_call_operand.hbm [shape: f32[512,256], index: 0, kind: input, shape index: {}]
  %s1 = inlined_call_operand.hbm [shape: f32[2,4,256], index: 1, kind: input, shape index: {}]
  %s2 = inlined_call_operand.hbm [shape: f32[2,4,256], index: 2, kind: output, shape index: {}]
  %s3 = sld [smem:[#allocation0]]
  $region26: #{tpu_custom_call.1} parent=0
    _
  %s5 = ssub.s32 1, %s3
  %s6 = scalar_select 0, %s5, %s3
  $region1: #{tpu_custom_call.1} parent=0
    #allocation2 [shape = 'u8[524288]{0}', space=vmem, size = 0x80000, scoped, tag = 'input window, operand 0, single buffered']
    #allocation3 [shape = 's32[1]{0}', space=sflag, size = 0x4, scoped, tag = 'scoped memory for tpu_custom_call.1']
    #allocation4 [shape = 's32[1]{0}', space=sflag, size = 0x4, scoped, tag = 'scoped memory for tpu_custom_call.1']
    #allocation5 [shape = 'u8[8192]{0}', space=vmem, size = 0x2000, scoped, tag = 'input window, operand 1, single buffered']
    #allocation6 [shape = 's32[1]{0}', space=sflag, size = 0x4, scoped, tag = 'scoped memory for tpu_custom_call.1']
    #allocation7 [shape = 'u8[8192]{0}', space=vmem, size = 0x2000, scoped, tag = 'output window, operand 0, single buffered']
    %7 = vsyncpa [#allocation3], 0
    %8 = vsyncpa [#allocation6], 0
    %9 = vsyncpa [#allocation4], 0
    // Predicated region
    $region2: #{tpu_custom_call.1} parent=1 // pred_check
      _
    $region3: #{tpu_custom_call.1} parent=1 // pred_check_branch
      %11 = sbr.rel (0) target = $region5
    $region4: #{tpu_custom_call.1} parent=1 // pred_region
      %s13 = ssub.s32 16384, 16384
      %14 = vsyncadd [#allocation3], %s13
      %s15 = sshll.u32 [#allocation2], 4
      %s16 = int_to_ptr.vmem [resolvable:$true] %s15
      %21 = dma.hbm_to_vmem [thread:$0]  %s0, 16384, %s16, [#allocation3], 256, 256, 16
    $region5: #{tpu_custom_call.1} parent=1 // pred_fallthru
      _
    // Predicated region
    $region6: #{tpu_custom_call.1} parent=1 // pred_check
      _
    $region7: #{tpu_custom_call.1} parent=1 // pred_check_branch
      %23 = sbr.rel (0) target = $region9
    $region8: #{tpu_custom_call.1} parent=1 // pred_region
      %s25 = ssub.s32 256, 256
      %26 = vsyncadd [#allocation6], %s25
      %s27 = sshll.u32 [#allocation5], 4
      %s28 = int_to_ptr.vmem [resolvable:$true] %s27
      %33 = dma.hbm_to_vmem [thread:$0]  %s1, 256, %s28, [#allocation6], 128, 128, 8
    $region9: #{tpu_custom_call.1} parent=1 // pred_fallthru
      _
    // Predicated region
    $region10: #{tpu_custom_call.1} parent=1 // pred_check
      _
    $region11: #{tpu_custom_call.1} parent=1 // pred_check_branch
      %35 = sbr.rel (0) target = $region13
    $region12: #{tpu_custom_call.1} parent=1 // pred_region
      %36 = dma.done [#allocation3], 16384
    $region13: #{tpu_custom_call.1} parent=1 // pred_fallthru
      _
    // Predicated region
    $region14: #{tpu_custom_call.1} parent=1 // pred_check
      _
    $region15: #{tpu_custom_call.1} parent=1 // pred_check_branch
      %38 = sbr.rel (0) target = $region17
    $region16: #{tpu_custom_call.1} parent=1 // pred_region
      %39 = dma.done [#allocation6], 256
    $region17: #{tpu_custom_call.1} parent=1 // pred_fallthru
      _
    %v40 = vld [vmem:[#allocation5] sm:$0xff]
    %v41 = vld [vmem:[#allocation5 + $0x8] sm:$0xff]
    %v44 = vcombine.high %v40, %v40
    %v45 = vcombine.high %v41, %v41
    %vm48 = vcmask 1043456
    %v49 = vsel %vm48, %v40, 0.0
    %v50 = vrot.slane %v49, 4
    %v51 = vadd.f32 %v49, %v50
    %v52 = vrot.slane %v51, 2
    %v53 = vadd.f32 %v51, %v52
    %v54 = vrot.slane %v53, 1
    %v55 = vadd.f32 %v53, %v54
    %v56 = vsel %vm48, %v44, 0.0
    %v57 = vrot.slane %v56, 4
    %v58 = vadd.f32 %v56, %v57
    %v59 = vrot.slane %v58, 2
    %v60 = vadd.f32 %v58, %v59
    %v61 = vrot.slane %v60, 1
    %v62 = vadd.f32 %v60, %v61
    %v63 = vsel %vm48, %v41, 0.0
    %v64 = vrot.slane %v63, 4
    %v65 = vadd.f32 %v63, %v64
    %v66 = vrot.slane %v65, 2
    %v67 = vadd.f32 %v65, %v66
    %v68 = vrot.slane %v67, 1
    %v69 = vadd.f32 %v67, %v68
    %v70 = vsel %vm48, %v45, 0.0
    %v71 = vrot.slane %v70, 4
    %v72 = vadd.f32 %v70, %v71
    %v73 = vrot.slane %v72, 2
    %v74 = vadd.f32 %v72, %v73
    %v75 = vrot.slane %v74, 1
    %v76 = vadd.f32 %v74, %v75
    %v77 = vrcp.pop 4.0
    %v78 = vmul.f32 %v55, %v77
    %v79 = vmul.f32 %v62, %v77
    %v80 = vmul.f32 %v69, %v77
    %v81 = vmul.f32 %v76, %v77
    %v82 = vsel %vm48, %v40, -inf
    %v83 = vrot.slane %v82, 4
    %v84 = vmax.f32 %v82, %v83
    %v85 = vrot.slane %v84, 2
    %v86 = vmax.f32 %v84, %v85
    %v87 = vrot.slane %v86, 1
    %v88 = vmax.f32 %v86, %v87
    %v89 = vsel %vm48, %v44, -inf
    %v90 = vrot.slane %v89, 4
    %v91 = vmax.f32 %v89, %v90
    %v92 = vrot.slane %v91, 2
    %v93 = vmax.f32 %v91, %v92
    %v94 = vrot.slane %v93, 1
    %v95 = vmax.f32 %v93, %v94
    %v96 = vsel %vm48, %v41, -inf
    %v97 = vrot.slane %v96, 4
    %v98 = vmax.f32 %v96, %v97
    %v99 = vrot.slane %v98, 2
    %v100 = vmax.f32 %v98, %v99
    %v101 = vrot.slane %v100, 1
    %v102 = vmax.f32 %v100, %v101
    %v103 = vsel %vm48, %v45, -inf
    %v104 = vrot.slane %v103, 4
    %v105 = vmax.f32 %v103, %v104
    %v106 = vrot.slane %v105, 2
    %v107 = vmax.f32 %v105, %v106
    %v108 = vrot.slane %v107, 1
    %v109 = vmax.f32 %v107, %v108
    %vm114 = vcmask 1041409
    %v115 = vsel %vm114, %v80, %v78
    %v116 = vsel %vm114, %v81, %v79
    %v123 = vsel %vm114, %v102, %v88
    %v124 = vsel %vm114, %v109, %v95
    %v127 = vld [vmem:[#allocation2] sm:$0xff]
    %v128 = vld [vmem:[#allocation2 + $0x8] sm:$0xff]
    %v129 = vld [vmem:[#allocation2 + $0x10] sm:$0xff]
    %v130 = vld [vmem:[#allocation2 + $0x18] sm:$0xff]
    %v131 = vld [vmem:[#allocation2 + $0x20] sm:$0xff]
    %v132 = vld [vmem:[#allocation2 + $0x28] sm:$0xff]
    %v133 = vld [vmem:[#allocation2 + $0x30] sm:$0xff]
    %v134 = vld [vmem:[#allocation2 + $0x38] sm:$0xff]
    %v135 = vld [vmem:[#allocation2 + $0x40] sm:$0xff]
    %v136 = vld [vmem:[#allocation2 + $0x48] sm:$0xff]
    %v137 = vld [vmem:[#allocation2 + $0x50] sm:$0xff]
    %v138 = vld [vmem:[#allocation2 + $0x58] sm:$0xff]
    %v139 = vld [vmem:[#allocation2 + $0x60] sm:$0xff]
    %v140 = vld [vmem:[#allocation2 + $0x68] sm:$0xff]
    %v141 = vld [vmem:[#allocation2 + $0x70] sm:$0xff]
    %v142 = vld [vmem:[#allocation2 + $0x78] sm:$0xff]
    %v143 = vld [vmem:[#allocation2 + $0x80] sm:$0xff]
    %v144 = vld [vmem:[#allocation2 + $0x88] sm:$0xff]
    %v145 = vld [vmem:[#allocation2 + $0x90] sm:$0xff]
    %v146 = vld [vmem:[#allocation2 + $0x98] sm:$0xff]
    %v147 = vld [vmem:[#allocation2 + $0xa0] sm:$0xff]
    %v148 = vld [vmem:[#allocation2 + $0xa8] sm:$0xff]
    %v149 = vld [vmem:[#allocation2 + $0xb0] sm:$0xff]
    %v150 = vld [vmem:[#allocation2 + $0xb8] sm:$0xff]
    %v151 = vld [vmem:[#allocation2 + $0xc0] sm:$0xff]
    %v152 = vld [vmem:[#allocation2 + $0xc8] sm:$0xff]
    %v153 = vld [vmem:[#allocation2 + $0xd0] sm:$0xff]
    %v154 = vld [vmem:[#allocation2 + $0xd8] sm:$0xff]
    %v155 = vld [vmem:[#allocation2 + $0xe0] sm:$0xff]
    %v156 = vld [vmem:[#allocation2 + $0xe8] sm:$0xff]
    %v157 = vld [vmem:[#allocation2 + $0xf0] sm:$0xff]
    %v158 = vld [vmem:[#allocation2 + $0xf8] sm:$0xff]
    %v159 = vld [vmem:[#allocation2 + $0x100] sm:$0xff]
    %v160 = vld [vmem:[#allocation2 + $0x108] sm:$0xff]
    %v161 = vld [vmem:[#allocation2 + $0x110] sm:$0xff]
    %v162 = vld [vmem:[#allocation2 + $0x118] sm:$0xff]
    %v163 = vld [vmem:[#allocation2 + $0x120] sm:$0xff]
    %v164 = vld [vmem:[#allocation2 + $0x128] sm:$0xff]
    %v165 = vld [vmem:[#allocation2 + $0x130] sm:$0xff]
    %v166 = vld [vmem:[#allocation2 + $0x138] sm:$0xff]
    %v167 = vld [vmem:[#allocation2 + $0x140] sm:$0xff]
    %v168 = vld [vmem:[#allocation2 + $0x148] sm:$0xff]
    %v169 = vld [vmem:[#allocation2 + $0x150] sm:$0xff]
    %v170 = vld [vmem:[#allocation2 + $0x158] sm:$0xff]
    %v171 = vld [vmem:[#allocation2 + $0x160] sm:$0xff]
    %v172 = vld [vmem:[#allocation2 + $0x168] sm:$0xff]
    %v173 = vld [vmem:[#allocation2 + $0x170] sm:$0xff]
    %v174 = vld [vmem:[#allocation2 + $0x178] sm:$0xff]
    %v175 = vld [vmem:[#allocation2 + $0x180] sm:$0xff]
    %v176 = vld [vmem:[#allocation2 + $0x188] sm:$0xff]
    %v177 = vld [vmem:[#allocation2 + $0x190] sm:$0xff]
    %v178 = vld [vmem:[#allocation2 + $0x198] sm:$0xff]
    %v179 = vld [vmem:[#allocation2 + $0x1a0] sm:$0xff]
    %v180 = vld [vmem:[#allocation2 + $0x1a8] sm:$0xff]
    %v181 = vld [vmem:[#allocation2 + $0x1b0] sm:$0xff]
    %v182 = vld [vmem:[#allocation2 + $0x1b8] sm:$0xff]
    %v183 = vld [vmem:[#allocation2 + $0x1c0] sm:$0xff]
    %v184 = vld [vmem:[#allocation2 + $0x1c8] sm:$0xff]
    %v185 = vld [vmem:[#allocation2 + $0x1d0] sm:$0xff]
    %v186 = vld [vmem:[#allocation2 + $0x1d8] sm:$0xff]
    %v187 = vld [vmem:[#allocation2 + $0x1e0] sm:$0xff]
    %v188 = vld [vmem:[#allocation2 + $0x1e8] sm:$0xff]
    %v189 = vld [vmem:[#allocation2 + $0x1f0] sm:$0xff]
    %v190 = vld [vmem:[#allocation2 + $0x1f8] sm:$0xff]
    %v191 = vld [vmem:[#allocation2 + $0x200] sm:$0xff]
    %v192 = vld [vmem:[#allocation2 + $0x208] sm:$0xff]
    %v193 = vld [vmem:[#allocation2 + $0x210] sm:$0xff]
    %v194 = vld [vmem:[#allocation2 + $0x218] sm:$0xff]
    %v195 = vld [vmem:[#allocation2 + $0x220] sm:$0xff]
    %v196 = vld [vmem:[#allocation2 + $0x228] sm:$0xff]
    %v197 = vld [vmem:[#allocation2 + $0x230] sm:$0xff]
    %v198 = vld [vmem:[#allocation2 + $0x238] sm:$0xff]
    %v199 = vld [vmem:[#allocation2 + $0x240] sm:$0xff]
    %v200 = vld [vmem:[#allocation2 + $0x248] sm:$0xff]
    %v201 = vld [vmem:[#allocation2 + $0x250] sm:$0xff]
    %v202 = vld [vmem:[#allocation2 + $0x258] sm:$0xff]
    %v203 = vld [vmem:[#allocation2 + $0x260] sm:$0xff]
    %v204 = vld [vmem:[#allocation2 + $0x268] sm:$0xff]
    %v205 = vld [vmem:[#allocation2 + $0x270] sm:$0xff]
    %v206 = vld [vmem:[#allocation2 + $0x278] sm:$0xff]
    %v207 = vld [vmem:[#allocation2 + $0x280] sm:$0xff]
    %v208 = vld [vmem:[#allocation2 + $0x288] sm:$0xff]
    %v209 = vld [vmem:[#allocation2 + $0x290] sm:$0xff]
    %v210 = vld [vmem:[#allocation2 + $0x298] sm:$0xff]
    %v211 = vld [vmem:[#allocation2 + $0x2a0] sm:$0xff]
    %v212 = vld [vmem:[#allocation2 + $0x2a8] sm:$0xff]
    %v213 = vld [vmem:[#allocation2 + $0x2b0] sm:$0xff]
    %v214 = vld [vmem:[#allocation2 + $0x2b8] sm:$0xff]
    %v215 = vld [vmem:[#allocation2 + $0x2c0] sm:$0xff]
    %v216 = vld [vmem:[#allocation2 + $0x2c8] sm:$0xff]
    %v217 = vld [vmem:[#allocation2 + $0x2d0] sm:$0xff]
    %v218 = vld [vmem:[#allocation2 + $0x2d8] sm:$0xff]
    %v219 = vld [vmem:[#allocation2 + $0x2e0] sm:$0xff]
    %v220 = vld [vmem:[#allocation2 + $0x2e8] sm:$0xff]
    %v221 = vld [vmem:[#allocation2 + $0x2f0] sm:$0xff]
    %v222 = vld [vmem:[#allocation2 + $0x2f8] sm:$0xff]
    %v223 = vld [vmem:[#allocation2 + $0x300] sm:$0xff]
    %v224 = vld [vmem:[#allocation2 + $0x308] sm:$0xff]
    %v225 = vld [vmem:[#allocation2 + $0x310] sm:$0xff]
    %v226 = vld [vmem:[#allocation2 + $0x318] sm:$0xff]
    %v227 = vld [vmem:[#allocation2 + $0x320] sm:$0xff]
    %v228 = vld [vmem:[#allocation2 + $0x328] sm:$0xff]
    %v229 = vld [vmem:[#allocation2 + $0x330] sm:$0xff]
    %v230 = vld [vmem:[#allocation2 + $0x338] sm:$0xff]
    %v231 = vld [vmem:[#allocation2 + $0x340] sm:$0xff]
    %v232 = vld [vmem:[#allocation2 + $0x348] sm:$0xff]
    %v233 = vld [vmem:[#allocation2 + $0x350] sm:$0xff]
    %v234 = vld [vmem:[#allocation2 + $0x358] sm:$0xff]
    %v235 = vld [vmem:[#allocation2 + $0x360] sm:$0xff]
    %v236 = vld [vmem:[#allocation2 + $0x368] sm:$0xff]
    %v237 = vld [vmem:[#allocation2 + $0x370] sm:$0xff]
    %v238 = vld [vmem:[#allocation2 + $0x378] sm:$0xff]
    %v239 = vld [vmem:[#allocation2 + $0x380] sm:$0xff]
    %v240 = vld [vmem:[#allocation2 + $0x388] sm:$0xff]
    %v241 = vld [vmem:[#allocation2 + $0x390] sm:$0xff]
    %v242 = vld [vmem:[#allocation2 + $0x398] sm:$0xff]
    %v243 = vld [vmem:[#allocation2 + $0x3a0] sm:$0xff]
    %v244 = vld [vmem:[#allocation2 + $0x3a8] sm:$0xff]
    %v245 = vld [vmem:[#allocation2 + $0x3b0] sm:$0xff]
    %v246 = vld [vmem:[#allocation2 + $0x3b8] sm:$0xff]
    %v247 = vld [vmem:[#allocation2 + $0x3c0] sm:$0xff]
    %v248 = vld [vmem:[#allocation2 + $0x3c8] sm:$0xff]
    %v249 = vld [vmem:[#allocation2 + $0x3d0] sm:$0xff]
    %v250 = vld [vmem:[#allocation2 + $0x3d8] sm:$0xff]
    %v251 = vld [vmem:[#allocation2 + $0x3e0] sm:$0xff]
    %v252 = vld [vmem:[#allocation2 + $0x3e8] sm:$0xff]
    %v253 = vld [vmem:[#allocation2 + $0x3f0] sm:$0xff]
    %v254 = vld [vmem:[#allocation2 + $0x3f8] sm:$0xff]
    %255 = vmatprep.subr.mxu0 %v158
    %256 = vmatpush1.msra.mxu0 %v157
    %257 = vmatprep.subr.mxu0 %v156
    %258 = vmatpush1.msra.mxu0 %v155
    %259 = vmatprep.subr.mxu0 %v154
    %260 = vmatpush1.msra.mxu0 %v153
    %261 = vmatprep.subr.mxu0 %v152
    %262 = vmatpush1.msra.mxu0 %v151
    %263 = vmatprep.subr.mxu0 %v150
    %264 = vmatpush1.msra.mxu0 %v149
    %265 = vmatprep.subr.mxu0 %v148
    %266 = vmatpush1.msra.mxu0 %v147
    %267 = vmatprep.subr.mxu0 %v146
    %268 = vmatpush1.msra.mxu0 %v145
    %269 = vmatprep.subr.mxu0 %v144
    %270 = vmatpush1.msra.mxu0 %v143
    %271 = vmatprep.subr.mxu0 %v142
    %272 = vmatpush1.msra.mxu0 %v141
    %273 = vmatprep.subr.mxu0 %v140
    %274 = vmatpush1.msra.mxu0 %v139
    %275 = vmatprep.subr.mxu0 %v138
    %276 = vmatpush1.msra.mxu0 %v137
    %277 = vmatprep.subr.mxu0 %v136
    %278 = vmatpush1.msra.mxu0 %v135
    %279 = vmatprep.subr.mxu0 %v134
    %280 = vmatpush1.msra.mxu0 %v133
    %281 = vmatprep.subr.mxu0 %v132
    %282 = vmatpush1.msra.mxu0 %v131
    %283 = vmatprep.subr.mxu0 %v130
    %284 = vmatpush1.msra.mxu0 %v129
    %285 = vmatprep.subr.mxu0 %v128
    %286 = vmatpush1.msra.mxu0 %v127
    %287 = vmatprep.subr.mxu0 %v190
    %288 = vmatpush2.msra.mxu0 %v189
    %289 = vmatprep.subr.mxu0 %v188
    %290 = vmatpush2.msra.mxu0 %v187
    %291 = vmatprep.subr.mxu0 %v186
    %292 = vmatpush2.msra.mxu0 %v185
    %293 = vmatprep.subr.mxu0 %v184
    %294 = vmatpush2.msra.mxu0 %v183
    %295 = vmatprep.subr.mxu0 %v182
    %296 = vmatpush2.msra.mxu0 %v181
    %297 = vmatprep.subr.mxu0 %v180
    %298 = vmatpush2.msra.mxu0 %v179
    %299 = vmatprep.subr.mxu0 %v178
    %300 = vmatpush2.msra.mxu0 %v177
    %301 = vmatprep.subr.mxu0 %v176
    %302 = vmatpush2.msra.mxu0 %v175
    %303 = vmatprep.subr.mxu0 %v174
    %304 = vmatpush2.msra.mxu0 %v173
    %305 = vmatprep.subr.mxu0 %v172
    %306 = vmatpush2.msra.mxu0 %v171
    %307 = vmatprep.subr.mxu0 %v170
    %308 = vmatpush2.msra.mxu0 %v169
    %309 = vmatprep.subr.mxu0 %v168
    %310 = vmatpush2.msra.mxu0 %v167
    %311 = vmatprep.subr.mxu0 %v166
    %312 = vmatpush2.msra.mxu0 %v165
    %313 = vmatprep.subr.mxu0 %v164
    %314 = vmatpush2.msra.mxu0 %v163
    %315 = vmatprep.subr.mxu0 %v162
    %316 = vmatpush2.msra.mxu0 %v161
    %317 = vmatprep.subr.mxu0 %v160
    %318 = vmatpush2.msra.mxu0 %v159
    %319 = vmatprep.mubr.f32.mxu0 %v116
    %320 = vmatmul.mubr.f32.gmra.mxu0 %v115
    %v321 = vpop.f32.mrf.mxu0
    %v322 = vadd.f32 0.0, %v321
    %v323 = vpop.f32.mrf.mxu0
    %v324 = vadd.f32 0.0, %v323
    %325 = vdwg.mxu0
    %326 = vmatprep.subr.mxu0 %v222
    %327 = vmatpush1.msra.mxu0 %v221
    %328 = vmatprep.subr.mxu0 %v220
    %329 = vmatpush1.msra.mxu0 %v219
    %330 = vmatprep.subr.mxu0 %v218
    %331 = vmatpush1.msra.mxu0 %v217
    %332 = vmatprep.subr.mxu0 %v216
    %333 = vmatpush1.msra.mxu0 %v215
    %334 = vmatprep.subr.mxu0 %v214
    %335 = vmatpush1.msra.mxu0 %v213
    %336 = vmatprep.subr.mxu0 %v212
    %337 = vmatpush1.msra.mxu0 %v211
    %338 = vmatprep.subr.mxu0 %v210
    %339 = vmatpush1.msra.mxu0 %v209
    %340 = vmatprep.subr.mxu0 %v208
    %341 = vmatpush1.msra.mxu0 %v207
    %342 = vmatprep.subr.mxu0 %v206
    %343 = vmatpush1.msra.mxu0 %v205
    %344 = vmatprep.subr.mxu0 %v204
    %345 = vmatpush1.msra.mxu0 %v203
    %346 = vmatprep.subr.mxu0 %v202
    %347 = vmatpush1.msra.mxu0 %v201
    %348 = vmatprep.subr.mxu0 %v200
    %349 = vmatpush1.msra.mxu0 %v199
    %350 = vmatprep.subr.mxu0 %v198
    %351 = vmatpush1.msra.mxu0 %v197
    %352 = vmatprep.subr.mxu0 %v196
    %353 = vmatpush1.msra.mxu0 %v195
    %354 = vmatprep.subr.mxu0 %v194
    %355 = vmatpush1.msra.mxu0 %v193
    %356 = vmatprep.subr.mxu0 %v192
    %357 = vmatpush1.msra.mxu0 %v191
    %358 = vmatprep.subr.mxu0 %v254
    %359 = vmatpush2.msra.mxu0 %v253
    %360 = vmatprep.subr.mxu0 %v252
    %361 = vmatpush2.msra.mxu0 %v251
    %362 = vmatprep.subr.mxu0 %v250
    %363 = vmatpush2.msra.mxu0 %v249
    %364 = vmatprep.subr.mxu0 %v248
    %365 = vmatpush2.msra.mxu0 %v247
    %366 = vmatprep.subr.mxu0 %v246
    %367 = vmatpush2.msra.mxu0 %v245
    %368 = vmatprep.subr.mxu0 %v244
    %369 = vmatpush2.msra.mxu0 %v243
    %370 = vmatprep.subr.mxu0 %v242
    %371 = vmatpush2.msra.mxu0 %v241
    %372 = vmatprep.subr.mxu0 %v240
    %373 = vmatpush2.msra.mxu0 %v239
    %374 = vmatprep.subr.mxu0 %v238
    %375 = vmatpush2.msra.mxu0 %v237
    %376 = vmatprep.subr.mxu0 %v236
    %377 = vmatpush2.msra.mxu0 %v235
    %378 = vmatprep.subr.mxu0 %v234
    %379 = vmatpush2.msra.mxu0 %v233
    %380 = vmatprep.subr.mxu0 %v232
    %381 = vmatpush2.msra.mxu0 %v231
    %382 = vmatprep.subr.mxu0 %v230
    %383 = vmatpush2.msra.mxu0 %v229
    %384 = vmatprep.subr.mxu0 %v228
    %385 = vmatpush2.msra.mxu0 %v227
    %386 = vmatprep.subr.mxu0 %v226
    %387 = vmatpush2.msra.mxu0 %v225
    %388 = vmatprep.subr.mxu0 %v224
    %389 = vmatpush2.msra.mxu0 %v223
    %390 = vmatprep.mubr.f32.mxu0 %v124
    %391 = vmatmul.mubr.f32.gmra.mxu0 %v123
    %v392 = vpop.f32.mrf.mxu0
    %v393 = vadd.f32 %v322, %v392
    %v394 = vpop.f32.mrf.mxu0
    %v395 = vadd.f32 %v324, %v394
    %396 = vdwg.mxu0
    %v397 = vxor.u32 %v393, 2147483648
    %v398 = vxor.u32 %v395, 2147483648
    %v399 = vmul.f32 %v397, 1.442695
    %v400 = vpow.pop %v399
    %v401 = vmul.f32 %v398, 1.442695
    %v402 = vpow.pop %v401
    %v403 = vadd.f32 %v400, 1.0
    %v404 = vadd.f32 %v402, 1.0
    %v405 = vrcp.pop %v403
    %v406 = vmul.f32 1.0, %v405
    %v407 = vrcp.pop %v404
    %v408 = vmul.f32 1.0, %v407
    %v411 = vcombine.low %v406, %v408
    %v413 = vunpack.c.l.s4 1966171168
    %v414 = vunpack.c.0.s8 %v413
    %v415 = vlaneseq
    %v416 = vshrl.u32 %v415, 7
    %v417 = vsub.s32 %v414, %v416
    %v418 = vrot.slane %v411, %v417
    %v419 = vcombine.high %v418, %v418
    %v421 = vunpack.c.l.s4 1966171168
    %v422 = vunpack.c.0.s8 %v421
    %v423 = vlaneseq
    %v424 = vshrl.u32 %v423, 7
    %v425 = vsub.s32 %v422, %v424
    %v426 = vrot.slane %v418, %v425
    %v428 = vunpack.c.l.s4 1966171168
    %v429 = vunpack.c.0.s8 %v428
    %v430 = vlaneseq
    %v431 = vshrl.u32 %v430, 7
    %v432 = vsub.s32 %v429, %v431
    %v433 = vrot.slane %v419, %v432
    %v434 = vlaneseq
    %v435 = vshrl.u32 %v434, 7
    %v436 = vsub.s32 0, %v435
    %v437 = vrot.slane %v426, %v436
    %v438 = vlaneseq
    %v439 = vshrl.u32 %v438, 7
    %v440 = vsub.s32 1, %v439
    %v441 = vrot.slane %v426, %v440
    %v442 = vlaneseq
    %v443 = vshrl.u32 %v442, 7
    %v444 = vsub.s32 0, %v443
    %v445 = vrot.slane %v433, %v444
    %v446 = vlaneseq
    %v447 = vshrl.u32 %v446, 7
    %v448 = vsub.s32 1, %v447
    %v449 = vrot.slane %v433, %v448
    %v454 = vmul.f32 %v437, %v40
    %v455 = vmul.f32 %v441, %v44
    %v456 = vmul.f32 %v445, %v41
    %v457 = vmul.f32 %v449, %v45
    %v462 = vcombine.low %v454, %v455
    %v463 = vcombine.low %v456, %v457
    %466 = vst [vmem:[#allocation7] sm:$0xff] %v462
    %467 = vst [vmem:[#allocation7 + $0x8] sm:$0xff] %v463
    // Predicated region
    $region18: #{tpu_custom_call.1} parent=1 // pred_check
      _
    $region19: #{tpu_custom_call.1} parent=1 // pred_check_branch
      %469 = sbr.rel (0) target = $region21
    $region20: #{tpu_custom_call.1} parent=1 // pred_region
      %s471 = ssub.s32 256, 256
      %472 = vsyncadd [#allocation4], %s471
      %s473 = sshll.u32 [#allocation7], 4
      %s474 = int_to_ptr.vmem [resolvable:$true] %s473
      %479 = dma.vmem_to_hbm [thread:$0]  %s474, 256, %s2, [#allocation4], 128, 128, 8
    $region21: #{tpu_custom_call.1} parent=1 // pred_fallthru
      _
    // Predicated region
    $region22: #{tpu_custom_call.1} parent=1 // pred_check
      _
    $region23: #{tpu_custom_call.1} parent=1 // pred_check_branch
      %481 = sbr.rel (0) target = $region25
    $region24: #{tpu_custom_call.1} parent=1 // pred_region
      %482 = dma.done [#allocation4], 256
    $region25: #{tpu_custom_call.1} parent=1 // pred_fallthru
      _
    %483 = vsyncpa [#allocation3], 1
    %484 = vsyncpa [#allocation6], 1
    %485 = vsyncpa [#allocation4], 1

</llo_original>
